<compile_context>
chip_gen: v7x
topology: tpu7x:2x2x1
jax: 0.10.0
libtpu: 0.0.40
codegen_flags: <defaults>
</compile_context>

<pallas_src>
import functools
import math

import jax
import jax.numpy as jnp
from jax import lax
from jax.experimental import pallas as pl
from jax.experimental.pallas import tpu as pltpu

BN_EPS = 1e-3


# -----------------------------------------------------------------------------
# Pallas kernel: conv matmul + maxpool/concat + BN + PReLU, all in one pass.
# -----------------------------------------------------------------------------
def _downsample_kernel(nconv, cin, pool, p_ref, w_ref, s_ref, b_ref, a_ref, o_ref):
    p = p_ref[...]                                                     # (TM, 9*Cin) bf16
    conv = jnp.dot(p, w_ref[...], preferred_element_type=jnp.float32)  # (TM, nConv) f32
    zc = conv * s_ref[:, :nconv] + b_ref[:, :nconv]                    # folded BN
    o_ref[:, :nconv] = jnp.where(zc >= 0.0, zc, a_ref[:, :nconv] * zc)  # PReLU
    if pool:
        # MaxPool2d(2, stride=2) taps == im2col taps (1,1),(1,2),(2,1),(2,2).
        mp = jnp.maximum(
            jnp.maximum(p[:, 4 * cin:5 * cin], p[:, 5 * cin:6 * cin]),
            jnp.maximum(p[:, 7 * cin:8 * cin], p[:, 8 * cin:9 * cin]),
        ).astype(jnp.float32)
        zp = mp * s_ref[:, nconv:nconv + cin] + b_ref[:, nconv:nconv + cin]
        o_ref[:, nconv:nconv + cin] = jnp.where(
            zp >= 0.0, zp, a_ref[:, nconv:nconv + cin] * zp)


def _row_tile(m):
    """Large tiles amortize per-step overhead; keep >=2 grid steps for v7x's 2 TCs."""
    if m >= 2048:
        return 1024
    half = (m + 1) // 2
    t = max(32, min(512, ((half + 31) // 32) * 32))
    return m if t >= m else t


def _fused_downsample(patches, w_mat, scale, bias, alpha, nconv, cin, pool):
    m, k = patches.shape
    nout = scale.shape[1]
    tm = _row_tile(m)
    grid = (pl.cdiv(m, tm),)
    kernel = functools.partial(_downsample_kernel, nconv, cin, pool)
    return pl.pallas_call(
        kernel,
        out_shape=jax.ShapeDtypeStruct((m, nout), jnp.float32),
        grid=grid,
        in_specs=[
            pl.BlockSpec((tm, k), lambda i: (i, 0)),        # patches (tiled over rows)
            pl.BlockSpec((k, nconv), lambda i: (0, 0)),     # weight  (resident)
            pl.BlockSpec((1, nout), lambda i: (0, 0)),      # BN scale
            pl.BlockSpec((1, nout), lambda i: (0, 0)),      # BN bias
            pl.BlockSpec((1, nout), lambda i: (0, 0)),      # PReLU alpha
        ],
        out_specs=pl.BlockSpec((tm, nout), lambda i: (i, 0)),
        compiler_params=pltpu.CompilerParams(dimension_semantics=("parallel",)),
    )(patches, w_mat, scale, bias, alpha)


# -----------------------------------------------------------------------------
# Whole-module forward (single jit so the layout glue fuses around the kernel).
# -----------------------------------------------------------------------------
@jax.jit
def downsampling_block_forward(x_nchw, params):
    w = params["w"]                                   # (nConv, nIn, 3, 3) PyTorch OIHW
    gamma, beta = params["gamma"], params["beta"]
    mean, var = params["mean"], params["var"]
    alpha = params["alpha"]

    n, cin, h, wsp = x_nchw.shape
    assert h % 2 == 0 and wsp % 2 == 0, "even spatial dims expected (stride-2 block)"
    nconv = w.shape[0]
    nout = gamma.shape[0]
    pool = cin < nout
    oh, ow = h // 2, wsp // 2

    x = jnp.transpose(x_nchw, (0, 2, 3, 1)).astype(jnp.float32)       # NHWC
    xp = jnp.pad(x, ((0, 0), (1, 1), (1, 1), (0, 0)))
    # im2col for k=3, stride=2, pad=1 (one fused XLA copy under jit).
    cols = [xp[:, ki:ki + 2 * oh:2, kj:kj + 2 * ow:2, :]
            for ki in range(3) for kj in range(3)]
    patches = jnp.concatenate(cols, axis=-1).reshape(n * oh * ow, 9 * cin)
    patches = patches.astype(jnp.bfloat16)

    w_mat = jnp.transpose(w, (2, 3, 1, 0)).reshape(9 * cin, nconv).astype(jnp.bfloat16)

    # Inference-mode BatchNorm folded into a per-channel affine.
    s = (gamma / jnp.sqrt(var + BN_EPS)).astype(jnp.float32)
    b = (beta - mean * s).astype(jnp.float32)

    out2d = _fused_downsample(
        patches, w_mat,
        s.reshape(1, nout), b.reshape(1, nout),
        alpha.reshape(1, nout).astype(jnp.float32),
        nconv, cin, pool)

    out = out2d.reshape(n, oh, ow, nout)
    return jnp.transpose(out, (0, 3, 1, 2))                           # back to NCHW


# -----------------------------------------------------------------------------
# Pure-JAX reference (XLA ops) for correctness checking.
# -----------------------------------------------------------------------------
@jax.jit
def reference_forward(x_nchw, params):
    w = params["w"]
    nout = params["gamma"].shape[0]
    cin = x_nchw.shape[1]
    y = lax.conv_general_dilated(
        x_nchw, w, window_strides=(2, 2), padding=((1, 1), (1, 1)),
        dimension_numbers=("NCHW", "OIHW", "NCHW"),
        precision=lax.Precision.HIGHEST)
    if cin < nout:
        mp = lax.reduce_window(x_nchw, -jnp.inf, lax.max,
                               (1, 1, 2, 2), (1, 1, 2, 2), "VALID")
        y = jnp.concatenate([y, mp], axis=1)
    s = params["gamma"] / jnp.sqrt(params["var"] + BN_EPS)
    b = params["beta"] - params["mean"] * s
    z = y * s[None, :, None, None] + b[None, :, None, None]
    a = params["alpha"][None, :, None, None]
    return jnp.where(z >= 0, z, a * z)


def make_params(key, n_in, n_out):
    nconv = n_out - n_in if n_in < n_out else n_out
    ks = jax.random.split(key, 6)
    w = jax.random.normal(ks[0], (nconv, n_in, 3, 3), jnp.float32) / math.sqrt(9 * n_in)
    gamma = 1.0 + 0.1 * jax.random.normal(ks[1], (n_out,), jnp.float32)
    beta = 0.1 * jax.random.normal(ks[2], (n_out,), jnp.float32)
    mean = 0.1 * jax.random.normal(ks[3], (n_out,), jnp.float32)
    var = 1.0 + jnp.abs(jax.random.normal(ks[4], (n_out,), jnp.float32))
    alpha = 0.25 + 0.01 * jax.random.normal(ks[5], (n_out,), jnp.float32)
    return dict(w=w, gamma=gamma, beta=beta, mean=mean, var=var, alpha=alpha)


if __name__ == "__main__":
    key = jax.random.PRNGKey(0)
    kx1, kp1, kx2, kp2 = jax.random.split(key, 4)

    # Case 1: nIn < nOut  -> conv(3x3,s2) + maxpool(2,2) concat + BN + PReLU
    n, n_in, h, wsp, n_out = 2, 16, 16, 16, 32
    x = jax.random.normal(kx1, (n, n_in, h, wsp), jnp.float32)
    params = make_params(kp1, n_in, n_out)
    out = jax.block_until_ready(downsampling_block_forward(x, params))
    assert out.shape == (n, n_out, h // 2, wsp // 2), out.shape
    ref = jax.block_until_ready(reference_forward(x, params))
    assert bool(jnp.allclose(out, ref, atol=8e-2, rtol=5e-2)), \
        float(jnp.max(jnp.abs(out - ref)))

    # Case 2: nIn >= nOut -> conv-only branch (no maxpool concat)
    n_in2, n_out2 = 32, 32
    x2 = jax.random.normal(kx2, (n, n_in2, h, wsp), jnp.float32)
    params2 = make_params(kp2, n_in2, n_out2)
    out2 = jax.block_until_ready(downsampling_block_forward(x2, params2))
    assert out2.shape == (n, n_out2, h // 2, wsp // 2), out2.shape
    ref2 = jax.block_until_ready(reference_forward(x2, params2))
    assert bool(jnp.allclose(out2, ref2, atol=8e-2, rtol=5e-2)), \
        float(jnp.max(jnp.abs(out2 - ref2)))

    print("KERNEL_OK")
</pallas_src>

<mosaic_0001>
module attributes {stable_mosaic.version = 11 : i64} {
  func.func @_downsample_kernel(%arg0: i32, %arg1: memref<64x144xbf16, #tpu.memory_space<vmem>>, %arg2: memref<144x16xbf16, #tpu.memory_space<vmem>>, %arg3: memref<1x32xf32, #tpu.memory_space<vmem>>, %arg4: memref<1x32xf32, #tpu.memory_space<vmem>>, %arg5: memref<1x32xf32, #tpu.memory_space<vmem>>, %arg6: memref<64x32xf32, #tpu.memory_space<vmem>>) attributes {dimension_semantics = [#tpu.dimension_semantics<parallel>], iteration_bounds = array<i64: 2>, scalar_prefetch = 0 : i64, scratch_operands = 0 : i64, tpu.core_type = #tpu.core_type<tc>, window_params = [{transform_indices = @transform_0, window_bounds = array<i64: 64, 144>}, {pipeline_mode = #tpu.pipeline_mode<synchronous>, transform_indices = @transform_1, window_bounds = array<i64: 144, 16>}, {pipeline_mode = #tpu.pipeline_mode<synchronous>, transform_indices = @transform_2, window_bounds = array<i64: 1, 32>}, {pipeline_mode = #tpu.pipeline_mode<synchronous>, transform_indices = @transform_3, window_bounds = array<i64: 1, 32>}, {pipeline_mode = #tpu.pipeline_mode<synchronous>, transform_indices = @transform_4, window_bounds = array<i64: 1, 32>}, {transform_indices = @transform_5, window_bounds = array<i64: 64, 32>}]} {
    %c0 = arith.constant 0 : index
    %c0_0 = arith.constant 0 : index
    %0 = vector.load %arg1[%c0, %c0_0] : memref<64x144xbf16, #tpu.memory_space<vmem>>, vector<64x144xbf16>
    %c0_1 = arith.constant 0 : index
    %c0_2 = arith.constant 0 : index
    %1 = vector.load %arg2[%c0_1, %c0_2] : memref<144x16xbf16, #tpu.memory_space<vmem>>, vector<144x16xbf16>
    %cst = arith.constant dense<0.000000e+00> : vector<64x16xf32>
    %2 = tpu.matmul %0, %1, %cst {dimension_numbers = #tpu.dot_dimension_numbers<[1], [0], [0], [1], [0, 0, 1, 1], [], []>} : vector<64x144xbf16>, vector<144x16xbf16>, vector<64x16xf32> -> vector<64x16xf32>
    %c0_3 = arith.constant 0 : index
    %c0_4 = arith.constant 0 : index
    %3 = vector.load %arg3[%c0_3, %c0_4] : memref<1x32xf32, #tpu.memory_space<vmem>>, vector<1x16xf32>
    %4 = vector.broadcast %3 : vector<1x16xf32> to vector<64x16xf32>
    %5 = arith.mulf %2, %4 : vector<64x16xf32>
    %c0_5 = arith.constant 0 : index
    %c0_6 = arith.constant 0 : index
    %6 = vector.load %arg4[%c0_5, %c0_6] : memref<1x32xf32, #tpu.memory_space<vmem>>, vector<1x16xf32>
    %7 = vector.broadcast %6 : vector<1x16xf32> to vector<64x16xf32>
    %8 = arith.addf %5, %7 : vector<64x16xf32>
    %cst_7 = arith.constant 0.000000e+00 : f32
    %9 = vector.broadcast %cst_7 : f32 to vector<64x16xf32>
    %10 = arith.cmpf oge, %8, %9 : vector<64x16xf32>
    %c0_8 = arith.constant 0 : index
    %c0_9 = arith.constant 0 : index
    %11 = vector.load %arg5[%c0_8, %c0_9] : memref<1x32xf32, #tpu.memory_space<vmem>>, vector<1x16xf32>
    %12 = vector.broadcast %11 : vector<1x16xf32> to vector<64x16xf32>
    %13 = arith.mulf %12, %8 : vector<64x16xf32>
    %14 = arith.select %10, %8, %13 : vector<64x16xi1>, vector<64x16xf32>
    %c0_10 = arith.constant 0 : index
    %c0_11 = arith.constant 0 : index
    %15 = vector.load %arg6[%c0_10, %c0_11] : memref<64x32xf32, #tpu.memory_space<vmem>>, vector<64x16xf32>
    tpu.vector_store %arg6[%c0_10, %c0_11], %14 {strides = array<i32>} : memref<64x32xf32, #tpu.memory_space<vmem>>, vector<64x16xf32>,
    %16 = vector.extract_strided_slice %0 {offsets = [0, 64], sizes = [64, 16], strides = [1, 1]} : vector<64x144xbf16> to vector<64x16xbf16>
    %17 = vector.extract_strided_slice %0 {offsets = [0, 80], sizes = [64, 16], strides = [1, 1]} : vector<64x144xbf16> to vector<64x16xbf16>
    %18 = arith.maximumf %16, %17 : vector<64x16xbf16>
    %19 = vector.extract_strided_slice %0 {offsets = [0, 112], sizes = [64, 16], strides = [1, 1]} : vector<64x144xbf16> to vector<64x16xbf16>
    %20 = vector.extract_strided_slice %0 {offsets = [0, 128], sizes = [64, 16], strides = [1, 1]} : vector<64x144xbf16> to vector<64x16xbf16>
    %21 = arith.maximumf %19, %20 : vector<64x16xbf16>
    %22 = arith.maximumf %18, %21 : vector<64x16xbf16>
    %23 = arith.extf %22 : vector<64x16xbf16> to vector<64x16xf32>
    %c0_12 = arith.constant 0 : index
    %c16 = arith.constant 16 : index
    %24 = vector.load %arg3[%c0_12, %c16] : memref<1x32xf32, #tpu.memory_space<vmem>>, vector<1x16xf32>
    %25 = vector.broadcast %24 : vector<1x16xf32> to vector<64x16xf32>
    %26 = arith.mulf %23, %25 : vector<64x16xf32>
    %c0_13 = arith.constant 0 : index
    %c16_14 = arith.constant 16 : index
    %27 = vector.load %arg4[%c0_13, %c16_14] : memref<1x32xf32, #tpu.memory_space<vmem>>, vector<1x16xf32>
    %28 = vector.broadcast %27 : vector<1x16xf32> to vector<64x16xf32>
    %29 = arith.addf %26, %28 : vector<64x16xf32>
    %cst_15 = arith.constant 0.000000e+00 : f32
    %30 = vector.broadcast %cst_15 : f32 to vector<64x16xf32>
    %31 = arith.cmpf oge, %29, %30 : vector<64x16xf32>
    %c0_16 = arith.constant 0 : index
    %c16_17 = arith.constant 16 : index
    %32 = vector.load %arg5[%c0_16, %c16_17] : memref<1x32xf32, #tpu.memory_space<vmem>>, vector<1x16xf32>
    %33 = vector.broadcast %32 : vector<1x16xf32> to vector<64x16xf32>
    %34 = arith.mulf %33, %29 : vector<64x16xf32>
    %35 = arith.select %31, %29, %34 : vector<64x16xi1>, vector<64x16xf32>
    %c0_18 = arith.constant 0 : index
    %c16_19 = arith.constant 16 : index
    %36 = vector.load %arg6[%c0_18, %c16_19] : memref<64x32xf32, #tpu.memory_space<vmem>>, vector<64x16xf32>
    tpu.vector_store %arg6[%c0_18, %c16_19], %35 {strides = array<i32>} : memref<64x32xf32, #tpu.memory_space<vmem>>, vector<64x16xf32>,
    return
  }
  func.func @transform_0(%arg0: i32) -> (i32, i32) {
    %c0_i32 = arith.constant 0 : i32
    %c0_i32_0 = arith.constant 0 : i32
    return %arg0, %c0_i32 : i32, i32
  }
  func.func @transform_1(%arg0: i32) -> (i32, i32) {
    %c0_i32 = arith.constant 0 : i32
    %c0_i32_0 = arith.constant 0 : i32
    %c0_i32_1 = arith.constant 0 : i32
    return %c0_i32, %c0_i32_0 : i32, i32
  }
  func.func @transform_2(%arg0: i32) -> (i32, i32) {
    %c0_i32 = arith.constant 0 : i32
    %c0_i32_0 = arith.constant 0 : i32
    %c0_i32_1 = arith.constant 0 : i32
    return %c0_i32, %c0_i32_0 : i32, i32
  }
  func.func @transform_3(%arg0: i32) -> (i32, i32) {
    %c0_i32 = arith.constant 0 : i32
    %c0_i32_0 = arith.constant 0 : i32
    %c0_i32_1 = arith.constant 0 : i32
    return %c0_i32, %c0_i32_0 : i32, i32
  }
  func.func @transform_4(%arg0: i32) -> (i32, i32) {
    %c0_i32 = arith.constant 0 : i32
    %c0_i32_0 = arith.constant 0 : i32
    %c0_i32_1 = arith.constant 0 : i32
    return %c0_i32, %c0_i32_0 : i32, i32
  }
  func.func @transform_5(%arg0: i32) -> (i32, i32) {
    %c0_i32 = arith.constant 0 : i32
    %c0_i32_0 = arith.constant 0 : i32
    return %arg0, %c0_i32 : i32, i32
  }
}

</mosaic_0001>

<llo_original>
// kernel: downsampling_block_forward.1
$region0: #{downsampling_block_forward.1}
  #allocation0 [shape = 'u32[]', space=smem, size = 0x4, offset = 0x4, fixed_abs, tag = 'smem constant byte address 0x4 - core index']
  #allocation1 [shape = 'u32[144,128]{1,0:T(1,128)}', space=vmem, size = 0x12000, scoped, tag = 'internal scratch']
  %s0 = inlined_call_operand.vmem [shape: bf16[128,144], index: 0, kind: input, shape index: {}]
  %s1 = inlined_call_operand.vmem [shape: bf16[144,16], index: 1, kind: input, shape index: {}]
  %s2 = inlined_call_operand.vmem [shape: f32[1,32], index: 2, kind: input, shape index: {}]
  %s3 = inlined_call_operand.vmem [shape: f32[1,32], index: 3, kind: input, shape index: {}]
  %s4 = inlined_call_operand.vmem [shape: f32[1,32], index: 4, kind: input, shape index: {}]
  %s5 = inlined_call_operand.hbm [shape: f32[128,32], index: 5, kind: output, shape index: {}]
  %s6 = sld [smem:[#allocation0]]
  $region53: #{downsampling_block_forward.1} parent=0
    _
  %s8 = ssub.s32 1, %s6
  %s9 = scalar_select 0, %s8, %s6
  $region1: #{downsampling_block_forward.1} parent=0
    #allocation2 [shape = 'u8[65536]{0}', space=vmem, size = 0x10000, scoped, tag = 'output window, operand 0']
    #allocation3 [shape = 's32[2]{0}', space=sflag, size = 0x8, scoped, tag = 'scoped memory for downsampling_block_forward.1']
    %10 = vsyncpa [#allocation3], 0
    %s11 = scalar_lea.sflag [#allocation3], 1
    %12 = vsyncpa %s11, 0
    loop: start=0, step=1, limit=4
    $region2: #{downsampling_block_forward.1} parent=1 // loop_pre_header
      _
    $region3: #{downsampling_block_forward.1} parent=1 // loop_header
      %s14 = sphi 0, %s18
      %p15 = scmp.ge.s32.totalorder %s14, 4
      %s24 = sphi 0, %s26
      %s27 = sphi 0, %s24
      %s28 = sphi 0, %s27
      %s44 = sphi 0, %s28
      %s48 = sphi 0, %s48
      %s50 = sphi 0, %s48
      %s51 = sphi 0, %s50
      %s65 = sphi 0, %s51
      %s69 = sphi 0, %s69
      %s71 = sphi 0, %s69
      %s72 = sphi 0, %s71
      %s86 = sphi 0, %s72
      %s90 = sphi 0, %s90
      %s92 = sphi 0, %s90
      %s93 = sphi 0, %s92
      %s107 = sphi 0, %s93
      %s111 = sphi 0, %s111
      %s113 = sphi 0, %s111
      %s114 = sphi 0, %s113
      %s128 = sphi 0, %s114
      %s134 = sphi 0, %s136
      %s137 = sphi 0, %s134
      %s138 = sphi 0, %s137
      %s154 = sphi 0, %s138
    $region4: #{downsampling_block_forward.1} parent=1 // loop_header_branch
      %17 = sbr.rel (%p15) target = $region8
    $region5: #{downsampling_block_forward.1} parent=1 // loop_body
      %s19 = ssub.s32 %s14, 1
      %s20 = ssub.s32 %s14, 2
      %s21 = sadd.s32 %s14, 1
      %s22 = ssub.s32 %s14, %s21
      %p23 = scmp.eq.s32.totalorder %s22, 0
      %s25 = sadd.s32 %s24, 1
      %s26 = scalar_select %p23, %s24, %s25
      %p29 = pneg %p23
      %p30 = scmp.eq.s32.totalorder %s14, 1
      %p31 = por %p29, %p30
      %p32 = scmp.ne.s32.totalorder %s24, %s27
      %p33 = scmp.eq.s32.totalorder %s14, 0
      %p34 = por %p32, %p33
      %p35 = scmp.ne.s32.totalorder %s24, %s27
      %p36 = scmp.eq.s32.totalorder %s19, 1
      %p37 = por %p35, %p36
      %p38 = scmp.ne.s32.totalorder %s27, %s28
      %p39 = scmp.eq.s32.totalorder %s19, 0
      %p40 = por %p38, %p39
      %p41 = scmp.ne.s32.totalorder %s27, %s28
      %p42 = scmp.eq.s32.totalorder %s20, 1
      %p43 = por %p41, %p42
      %p45 = scmp.ne.s32.totalorder %s28, %s44
      %p46 = scmp.eq.s32.totalorder %s20, 0
      %p47 = por %p45, %p46
      %s49 = sadd.s32 %s48, 1
      %p52 = scmp.eq.s32.totalorder %s14, 1
      %p53 = scmp.ne.s32.totalorder %s48, %s50
      %p54 = scmp.eq.s32.totalorder %s14, 0
      %p55 = por %p53, %p54
      %p56 = scmp.ne.s32.totalorder %s48, %s50
      %p57 = scmp.eq.s32.totalorder %s19, 1
      %p58 = por %p56, %p57
      %p59 = scmp.ne.s32.totalorder %s50, %s51
      %p60 = scmp.eq.s32.totalorder %s19, 0
      %p61 = por %p59, %p60
      %p62 = scmp.ne.s32.totalorder %s50, %s51
      %p63 = scmp.eq.s32.totalorder %s20, 1
      %p64 = por %p62, %p63
      %p66 = scmp.ne.s32.totalorder %s51, %s65
      %p67 = scmp.eq.s32.totalorder %s20, 0
      %p68 = por %p66, %p67
      %s70 = sadd.s32 %s69, 1
      %p73 = scmp.eq.s32.totalorder %s14, 1
      %p74 = scmp.ne.s32.totalorder %s69, %s71
      %p75 = scmp.eq.s32.totalorder %s14, 0
      %p76 = por %p74, %p75
      %p77 = scmp.ne.s32.totalorder %s69, %s71
      %p78 = scmp.eq.s32.totalorder %s19, 1
      %p79 = por %p77, %p78
      %p80 = scmp.ne.s32.totalorder %s71, %s72
      %p81 = scmp.eq.s32.totalorder %s19, 0
      %p82 = por %p80, %p81
      %p83 = scmp.ne.s32.totalorder %s71, %s72
      %p84 = scmp.eq.s32.totalorder %s20, 1
      %p85 = por %p83, %p84
      %p87 = scmp.ne.s32.totalorder %s72, %s86
      %p88 = scmp.eq.s32.totalorder %s20, 0
      %p89 = por %p87, %p88
      %s91 = sadd.s32 %s90, 1
      %p94 = scmp.eq.s32.totalorder %s14, 1
      %p95 = scmp.ne.s32.totalorder %s90, %s92
      %p96 = scmp.eq.s32.totalorder %s14, 0
      %p97 = por %p95, %p96
      %p98 = scmp.ne.s32.totalorder %s90, %s92
      %p99 = scmp.eq.s32.totalorder %s19, 1
      %p100 = por %p98, %p99
      %p101 = scmp.ne.s32.totalorder %s92, %s93
      %p102 = scmp.eq.s32.totalorder %s19, 0
      %p103 = por %p101, %p102
      %p104 = scmp.ne.s32.totalorder %s92, %s93
      %p105 = scmp.eq.s32.totalorder %s20, 1
      %p106 = por %p104, %p105
      %p108 = scmp.ne.s32.totalorder %s93, %s107
      %p109 = scmp.eq.s32.totalorder %s20, 0
      %p110 = por %p108, %p109
      %s112 = sadd.s32 %s111, 1
      %p115 = scmp.eq.s32.totalorder %s14, 1
      %p116 = scmp.ne.s32.totalorder %s111, %s113
      %p117 = scmp.eq.s32.totalorder %s14, 0
      %p118 = por %p116, %p117
      %p119 = scmp.ne.s32.totalorder %s111, %s113
      %p120 = scmp.eq.s32.totalorder %s19, 1
      %p121 = por %p119, %p120
      %p122 = scmp.ne.s32.totalorder %s113, %s114
      %p123 = scmp.eq.s32.totalorder %s19, 0
      %p124 = por %p122, %p123
      %p125 = scmp.ne.s32.totalorder %s113, %s114
      %p126 = scmp.eq.s32.totalorder %s20, 1
      %p127 = por %p125, %p126
      %p129 = scmp.ne.s32.totalorder %s114, %s128
      %p130 = scmp.eq.s32.totalorder %s20, 0
      %p131 = por %p129, %p130
      %s132 = ssub.s32 %s14, %s21
      %p133 = scmp.eq.s32.totalorder %s132, 0
      %s135 = sadd.s32 %s134, 1
      %s136 = scalar_select %p133, %s134, %s135
      %p139 = pneg %p133
      %p140 = scmp.eq.s32.totalorder %s14, 1
      %p141 = por %p139, %p140
      %p142 = scmp.ne.s32.totalorder %s134, %s137
      %p143 = scmp.eq.s32.totalorder %s14, 0
      %p144 = por %p142, %p143
      %p145 = scmp.ne.s32.totalorder %s134, %s137
      %p146 = scmp.eq.s32.totalorder %s19, 1
      %p147 = por %p145, %p146
      %p148 = scmp.ne.s32.totalorder %s137, %s138
      %p149 = scmp.eq.s32.totalorder %s19, 0
      %p150 = por %p148, %p149
      %p151 = scmp.ne.s32.totalorder %s137, %s138
      %p152 = scmp.eq.s32.totalorder %s20, 1
      %p153 = por %p151, %p152
      %p155 = scmp.ne.s32.totalorder %s138, %s154
      %p156 = scmp.eq.s32.totalorder %s20, 0
      %p157 = por %p155, %p156
      %p158 = scmp.le.s32.totalorder 1, %s14
      %p159 = scmp.lt.s32.totalorder %s14, 3
      %p160 = pnand %p158, %p159
      %p161 = pneg %p160
      // Predicated region
      $region9: #{downsampling_block_forward.1} parent=5 // pred_check
        _
      $region10: #{downsampling_block_forward.1} parent=5 // pred_check_branch
        %163 = sbr.rel (%p160) target = $region12
      $region11: #{downsampling_block_forward.1} parent=5 // pred_region
        %s164 = ssub.s32 %s14, 1
        // Predicated region
        $region13: #{downsampling_block_forward.1} parent=11 // pred_check
          %p165 = pneg %p61
        $region14: #{downsampling_block_forward.1} parent=11 // pred_check_branch
          %167 = sbr.rel (%p165) target = $region16
        $region15: #{downsampling_block_forward.1} parent=11 // pred_region
          _
        $region16: #{downsampling_block_forward.1} parent=11 // pred_fallthru
          _
        // Predicated region
        $region17: #{downsampling_block_forward.1} parent=11 // pred_check
          %p168 = pneg %p82
        $region18: #{downsampling_block_forward.1} parent=11 // pred_check_branch
          %170 = sbr.rel (%p168) target = $region20
        $region19: #{downsampling_block_forward.1} parent=11 // pred_region
          _
        $region20: #{downsampling_block_forward.1} parent=11 // pred_fallthru
          _
        // Predicated region
        $region21: #{downsampling_block_forward.1} parent=11 // pred_check
          %p171 = pneg %p103
        $region22: #{downsampling_block_forward.1} parent=11 // pred_check_branch
          %173 = sbr.rel (%p171) target = $region24
        $region23: #{downsampling_block_forward.1} parent=11 // pred_region
          _
        $region24: #{downsampling_block_forward.1} parent=11 // pred_fallthru
          _
        // Predicated region
        $region25: #{downsampling_block_forward.1} parent=11 // pred_check
          %p174 = pneg %p124
        $region26: #{downsampling_block_forward.1} parent=11 // pred_check_branch
          %176 = sbr.rel (%p174) target = $region28
        $region27: #{downsampling_block_forward.1} parent=11 // pred_region
          _
        $region28: #{downsampling_block_forward.1} parent=11 // pred_fallthru
          _
      $region12: #{downsampling_block_forward.1} parent=5 // pred_fallthru
        _
      %p177 = scmp.lt.s32.totalorder %s14, 2
      // Predicated region
      $region29: #{downsampling_block_forward.1} parent=5 // pred_check
        %p178 = pneg %p177
      $region30: #{downsampling_block_forward.1} parent=5 // pred_check_branch
        %180 = sbr.rel (%p178) target = $region32
      $region31: #{downsampling_block_forward.1} parent=5 // pred_region
        // Predicated region
        $region33: #{downsampling_block_forward.1} parent=31 // pred_check
          %p181 = pneg %p34
        $region34: #{downsampling_block_forward.1} parent=31 // pred_check_branch
          %183 = sbr.rel (%p181) target = $region36
        $region35: #{downsampling_block_forward.1} parent=31 // pred_region
          %s184 = smul.u32 8, %s14
          %p185 = scmp.lt.s32.totalorder %s184, 15
          %s186 = scalar_select %p185, %s184, 15
          %s187 = smul.addr %s186, 2
          %s188 = smul.addr %s187, 4
          %s189 = scalar_lea.vmem %s0, %s188
          %s190 = smul.u32 8, %s14
        $region36: #{downsampling_block_forward.1} parent=31 // pred_fallthru
          _
      $region32: #{downsampling_block_forward.1} parent=5 // pred_fallthru
        _
      %p191 = scmp.le.s32.totalorder 1, %s14
      %p192 = scmp.lt.s32.totalorder %s14, 3
      %p193 = pnand %p191, %p192
      %p194 = pneg %p193
      // Predicated region
      $region37: #{downsampling_block_forward.1} parent=5 // pred_check
        _
      $region38: #{downsampling_block_forward.1} parent=5 // pred_check_branch
        %196 = sbr.rel (%p193) target = $region40
      $region39: #{downsampling_block_forward.1} parent=5 // pred_region
        %s197 = ssub.s32 %s14, 1
        %s198 = smul.u32 8, %s19
        %p199 = scmp.lt.s32.totalorder %s198, 15
        %s200 = scalar_select %p199, %s198, 15
        %s201 = smul.addr %s200, 2
        %s202 = smul.addr %s201, 4
        %s203 = scalar_lea.vmem %s0, %s202
        %p204 = pneg %p40
        %p205 = pneg %p37
        %p206 = pneg %p61
        %p207 = pneg %p58
        %p208 = pneg %p82
        %p209 = pneg %p79
        %p210 = pneg %p103
        %p211 = pneg %p100
        %p212 = pneg %p124
        %p213 = pneg %p121
        %p214 = pneg %p150
        %p215 = pneg %p147
        %s216 = sand.u32 %s137, 1
        %s217 = scalar_lea.sflag [#allocation3], %s216
        %s218 = sand.u32 %s137, 1
        %s219 = smul.addr %s218, 64
        %s220 = scalar_lea.vmem [#allocation2], %s219
        %s221 = smul.u32 8, %s19
        %p222 = scmp.lt.s32.totalorder %s221, 15
        %s223 = scalar_select %p222, %s221, 15
        %s224 = smul.addr %s223, 2
        %s225 = smul.addr %s224, 4
        %s226 = scalar_lea.vmem %s0, %s225
        %s227 = smul.u32 8, %s19
        %s228 = smul.u32 8, %s19
        %v230 = vld [vmem:[%s226] sm:$0xff]
        %v231 = vld [vmem:[%s226 + $0x8] sm:$0xff]
        %v232 = vld [vmem:[%s226 + $0x10] sm:$0xff]
        %v233 = vld [vmem:[%s226 + $0x18] sm:$0xff]
        %v234 = vld [vmem:[%s226 + $0x20] sm:$0xff]
        %v235 = vld [vmem:[%s226 + $0x28] sm:$0xff]
        %v236 = vld [vmem:[%s226 + $0x30] sm:$0xff]
        %v237 = vld [vmem:[%s226 + $0x38] sm:$0xff]
        %v238 = vld [vmem:[%s1] sm:$0xf]
        %v239 = vld [vmem:[%s1 + $0x4] sm:$0xf]
        %v240 = vld [vmem:[%s1 + $0x8] sm:$0xf]
        %v241 = vld [vmem:[%s1 + $0xc] sm:$0xf]
        %v242 = vld [vmem:[%s1 + $0x10] sm:$0xf]
        %v243 = vld [vmem:[%s1 + $0x14] sm:$0xf]
        %v244 = vld [vmem:[%s1 + $0x18] sm:$0xf]
        %v245 = vld [vmem:[%s1 + $0x1c] sm:$0xf]
        %v246 = vld [vmem:[%s1 + $0x20] sm:$0xf]
        %v247 = vld [vmem:[%s1 + $0x24] sm:$0xf]
        %v248 = vld [vmem:[%s1 + $0x28] sm:$0xf]
        %v249 = vld [vmem:[%s1 + $0x2c] sm:$0xf]
        %v250 = vld [vmem:[%s1 + $0x30] sm:$0xf]
        %v251 = vld [vmem:[%s1 + $0x34] sm:$0xf]
        %v252 = vld [vmem:[%s1 + $0x38] sm:$0xf]
        %v253 = vld [vmem:[%s1 + $0x3c] sm:$0xf]
        %v254 = vld [vmem:[%s1 + $0x40] sm:$0xf]
        %v255 = vld [vmem:[%s1 + $0x44] sm:$0xf]
        %v264 = vunpack.c.l.b16 %v230
        %v265 = vunpack.c.h.b16 %v230
        %v266 = vunpack.c.l.b16 %v231
        %v267 = vunpack.c.h.b16 %v231
        %v268 = vunpack.c.l.b16 %v232
        %v269 = vunpack.c.h.b16 %v232
        %v270 = vunpack.c.l.b16 %v233
        %v271 = vunpack.c.h.b16 %v233
        %v272 = vunpack.c.l.b16 %v234
        %v273 = vunpack.c.h.b16 %v234
        %v274 = vunpack.c.l.b16 %v235
        %v275 = vunpack.c.h.b16 %v235
        %v276 = vunpack.c.l.b16 %v236
        %v277 = vunpack.c.h.b16 %v236
        %v278 = vunpack.c.l.b16 %v237
        %v279 = vunpack.c.h.b16 %v237
        %v280 = vpack.c.b16 %v266, %v264
        %v281 = vpack.c.b16 %v267, %v265
        %v282 = vpack.c.b16 %v270, %v268
        %v283 = vpack.c.b16 %v271, %v269
        %v284 = vpack.c.b16 %v274, %v272
        %v285 = vpack.c.b16 %v275, %v273
        %v286 = vpack.c.b16 %v278, %v276
        %v287 = vpack.c.b16 %v279, %v277
        %v310 = vunpack.c.l.b16 %v238
        %v311 = vunpack.c.l.b16 %v239
        %v312 = vunpack.c.l.b16 %v240
        %v313 = vunpack.c.l.b16 %v241
        %v314 = vunpack.c.l.b16 %v242
        %v315 = vunpack.c.l.b16 %v243
        %v316 = vunpack.c.l.b16 %v244
        %v317 = vunpack.c.l.b16 %v245
        %v318 = vunpack.c.l.b16 %v246
        %v319 = vunpack.c.l.b16 %v247
        %v320 = vunpack.c.l.b16 %v248
        %v321 = vunpack.c.l.b16 %v249
        %v322 = vunpack.c.l.b16 %v250
        %v323 = vunpack.c.l.b16 %v251
        %v324 = vunpack.c.l.b16 %v252
        %v325 = vunpack.c.l.b16 %v253
        %v326 = vunpack.c.l.b16 %v254
        %v327 = vunpack.c.l.b16 %v255
        %v328 = vpack.c.b16 %v311, %v310
        %v329 = vpack.c.b16 %v313, %v312
        %v330 = vpack.c.b16 %v315, %v314
        %v331 = vpack.c.b16 %v317, %v316
        %v332 = vpack.c.b16 %v319, %v318
        %v333 = vpack.c.b16 %v321, %v320
        %v334 = vpack.c.b16 %v323, %v322
        %v335 = vpack.c.b16 %v325, %v324
        %v336 = vpack.c.b16 %v327, %v326
        %vm346 = vcmask 130048
        %v348 = vsel %vm346, %v281, 0
        %v351 = vsel %vm346, %v283, 0
        %v354 = vsel %vm346, %v285, 0
        %v357 = vsel %vm346, %v287, 0
        %359 = vmatprep.subr.bf16.mxu0 0
        %360 = vmatpush1.bf16.msra.mxu0 %v328
        %361 = vmatprep.subr.bf16.mxu0 0
        %362 = vmatpush1.bf16.msra.mxu0 %v329
        %363 = vmatprep.subr.bf16.mxu0 0
        %364 = vmatpush1.bf16.msra.mxu0 %v330
        %365 = vmatprep.subr.bf16.mxu0 0
        %366 = vmatpush1.bf16.msra.mxu0 %v331
        %367 = vmatprep.subr.bf16.mxu0 0
        %368 = vmatpush1.bf16.msra.mxu0 %v332
        %369 = vmatprep.subr.bf16.mxu0 0
        %370 = vmatpush1.bf16.msra.mxu0 %v333
        %371 = vmatprep.subr.bf16.mxu0 0
        %372 = vmatpush1.bf16.msra.mxu0 %v334
        %373 = vmatprep.subr.bf16.mxu0 0
        %374 = vmatpush1.bf16.msra.mxu0 %v335
        %375 = vmatprep.subr.bf16.mxu0 0
        %376 = vmatpush1.bf16.msra.mxu0 %v336
        %377 = vmatprep.subr.bf16.mxu0 0
        %378 = vmatpush1.bf16.msra.mxu0 0
        %379 = vmatprep.subr.bf16.mxu0 0
        %380 = vmatpush1.bf16.msra.mxu0 0
        %381 = vmatprep.subr.bf16.mxu0 0
        %382 = vmatpush1.bf16.msra.mxu0 0
        %383 = vmatprep.subr.bf16.mxu0 0
        %384 = vmatpush1.bf16.msra.mxu0 0
        %385 = vmatprep.subr.bf16.mxu0 0
        %386 = vmatpush1.bf16.msra.mxu0 0
        %387 = vmatprep.subr.bf16.mxu0 0
        %388 = vmatpush1.bf16.msra.mxu0 0
        %389 = vmatprep.subr.bf16.mxu0 0
        %390 = vmatpush1.bf16.msra.mxu0 0
        %391 = vmatprep.mubr.bf16.mxu0 %v348
        %392 = vmatmul.mubr.bf16.gmra.mrb[0].mxu0 %v280
        %v393 = vpop.f32.mrb[0].mxu0
        %v394 = vadd.f32 0.0, %v393
        %v395 = vpop.f32.mrb[0].mxu0
        %v396 = vpop.f32.mrb[0].mxu0
        %v397 = vadd.f32 0.0, %v396
        %v398 = vpop.f32.mrb[0].mxu0
        %399 = vmatprep.mubr.bf16.mxu0 %v351
        %400 = vmatmul.mubr.bf16.gmra.mrb[0].mxu0 %v282
        %v401 = vpop.f32.mrb[0].mxu0
        %v402 = vadd.f32 0.0, %v401
        %v403 = vpop.f32.mrb[0].mxu0
        %v404 = vpop.f32.mrb[0].mxu0
        %v405 = vadd.f32 0.0, %v404
        %v406 = vpop.f32.mrb[0].mxu0
        %407 = vmatprep.mubr.bf16.mxu0 %v354
        %408 = vmatmul.mubr.bf16.gmra.mrb[0].mxu0 %v284
        %v409 = vpop.f32.mrb[0].mxu0
        %v410 = vadd.f32 0.0, %v409
        %v411 = vpop.f32.mrb[0].mxu0
        %v412 = vpop.f32.mrb[0].mxu0
        %v413 = vadd.f32 0.0, %v412
        %v414 = vpop.f32.mrb[0].mxu0
        %415 = vmatprep.mubr.bf16.mxu0 %v357
        %416 = vmatmul.mubr.bf16.gmra.mrb[0].mxu0 %v286
        %v417 = vpop.f32.mrb[0].mxu0
        %v418 = vadd.f32 0.0, %v417
        %v419 = vpop.f32.mrb[0].mxu0
        %v420 = vpop.f32.mrb[0].mxu0
        %v421 = vadd.f32 0.0, %v420
        %v422 = vpop.f32.mrb[0].mxu0
        %423 = vdwg.mxu0
        %v424 = vld [vmem:[%s2] sm:$0x1]
        %v426 = vlaneseq
        %v427 = vshrl.u32 %v426, 7
        %v428 = vsub.s32 0, %v427
        %v429 = vrot.slane %v424, %v428
        %v431 = vmul.f32 %v394, %v429
        %v432 = vmul.f32 %v397, %v429
        %v433 = vmul.f32 %v402, %v429
        %v434 = vmul.f32 %v405, %v429
        %v435 = vmul.f32 %v410, %v429
        %v436 = vmul.f32 %v413, %v429
        %v437 = vmul.f32 %v418, %v429
        %v438 = vmul.f32 %v421, %v429
        %v439 = vld [vmem:[%s3] sm:$0x1]
        %v441 = vlaneseq
        %v442 = vshrl.u32 %v441, 7
        %v443 = vsub.s32 0, %v442
        %v444 = vrot.slane %v439, %v443
        %v446 = vadd.f32 %v431, %v444
        %v447 = vadd.f32 %v432, %v444
        %v448 = vadd.f32 %v433, %v444
        %v449 = vadd.f32 %v434, %v444
        %v450 = vadd.f32 %v435, %v444
        %v451 = vadd.f32 %v436, %v444
        %v452 = vadd.f32 %v437, %v444
        %v453 = vadd.f32 %v438, %v444
        %vm454 = vcmp.ge.f32.partialorder %v446, 0.0
        %vm455 = vcmp.ge.f32.partialorder %v447, 0.0
        %vm456 = vcmp.ge.f32.partialorder %v448, 0.0
        %vm457 = vcmp.ge.f32.partialorder %v449, 0.0
        %vm458 = vcmp.ge.f32.partialorder %v450, 0.0
        %vm459 = vcmp.ge.f32.partialorder %v451, 0.0
        %vm460 = vcmp.ge.f32.partialorder %v452, 0.0
        %vm461 = vcmp.ge.f32.partialorder %v453, 0.0
        %v462 = vld [vmem:[%s4] sm:$0x1]
        %v464 = vlaneseq
        %v465 = vshrl.u32 %v464, 7
        %v466 = vsub.s32 0, %v465
        %v467 = vrot.slane %v462, %v466
        %v469 = vmul.f32 %v467, %v446
        %v470 = vmul.f32 %v467, %v447
        %v471 = vmul.f32 %v467, %v448
        %v472 = vmul.f32 %v467, %v449
        %v473 = vmul.f32 %v467, %v450
        %v474 = vmul.f32 %v467, %v451
        %v475 = vmul.f32 %v467, %v452
        %v476 = vmul.f32 %v467, %v453
        %v477 = vsel %vm454, %v446, %v469
        %v478 = vsel %vm455, %v447, %v470
        %v479 = vsel %vm456, %v448, %v471
        %v480 = vsel %vm457, %v449, %v472
        %v481 = vsel %vm458, %v450, %v473
        %v482 = vsel %vm459, %v451, %v474
        %v483 = vsel %vm460, %v452, %v475
        %v484 = vsel %vm461, %v453, %v476
        %485 = vst.msk [vmem:[%s220] sm:$0xff] %vm346, %v477
        %486 = vst.msk [vmem:[%s220 + $0x8] sm:$0xff] %vm346, %v478
        %487 = vst.msk [vmem:[%s220 + $0x10] sm:$0xff] %vm346, %v479
        %488 = vst.msk [vmem:[%s220 + $0x18] sm:$0xff] %vm346, %v480
        %489 = vst.msk [vmem:[%s220 + $0x20] sm:$0xff] %vm346, %v481
        %490 = vst.msk [vmem:[%s220 + $0x28] sm:$0xff] %vm346, %v482
        %491 = vst.msk [vmem:[%s220 + $0x30] sm:$0xff] %vm346, %v483
        %492 = vst.msk [vmem:[%s220 + $0x38] sm:$0xff] %vm346, %v484
        %493 = vrot.lane.b32.xlu0 %v230, 112
        %v494 = vpop.permute.xlu0 %493
        %495 = vrot.lane.b32.xlu0 %v231, 112
        %v496 = vpop.permute.xlu0 %495
        %497 = vrot.lane.b32.xlu0 %v232, 112
        %v498 = vpop.permute.xlu0 %497
        %499 = vrot.lane.b32.xlu0 %v233, 112
        %v500 = vpop.permute.xlu0 %499
        %501 = vrot.lane.b32.xlu0 %v234, 112
        %v502 = vpop.permute.xlu0 %501
        %503 = vrot.lane.b32.xlu0 %v235, 112
        %v504 = vpop.permute.xlu0 %503
        %505 = vrot.lane.b32.xlu0 %v236, 112
        %v506 = vpop.permute.xlu0 %505
        %507 = vrot.lane.b32.xlu0 %v237, 112
        %v508 = vpop.permute.xlu0 %507
        %v517 = vmax.bf16 %v230, %v494
        %v518 = vmax.bf16 %v231, %v496
        %v519 = vmax.bf16 %v232, %v498
        %v520 = vmax.bf16 %v233, %v500
        %v521 = vmax.bf16 %v234, %v502
        %v522 = vmax.bf16 %v235, %v504
        %v523 = vmax.bf16 %v236, %v506
        %v524 = vmax.bf16 %v237, %v508
        %v525 = vrot.slane %v494, 4
        %v526 = vrot.slane %v496, 4
        %v527 = vrot.slane %v498, 4
        %v528 = vrot.slane %v500, 4
        %v529 = vrot.slane %v502, 4
        %v530 = vrot.slane %v504, 4
        %v531 = vrot.slane %v506, 4
        %v532 = vrot.slane %v508, 4
        %vm533 = vcmask 916480
        %v534 = vsel %vm533, %v494, %v525
        %v535 = vsel %vm533, %v496, %v526
        %v536 = vsel %vm533, %v498, %v527
        %v537 = vsel %vm533, %v500, %v528
        %v538 = vsel %vm533, %v502, %v529
        %v539 = vsel %vm533, %v504, %v530
        %v540 = vsel %vm533, %v506, %v531
        %v541 = vsel %vm533, %v508, %v532
        %v550 = vmax.bf16 %v230, %v534
        %v551 = vmax.bf16 %v231, %v535
        %v552 = vmax.bf16 %v232, %v536
        %v553 = vmax.bf16 %v233, %v537
        %v554 = vmax.bf16 %v234, %v538
        %v555 = vmax.bf16 %v235, %v539
        %v556 = vmax.bf16 %v236, %v540
        %v557 = vmax.bf16 %v237, %v541
        %566 = vrot.lane.b32.xlu0 %v550, 80
        %v567 = vpop.permute.xlu0 %566
        %568 = vrot.lane.b32.xlu0 %v551, 80
        %v569 = vpop.permute.xlu0 %568
        %570 = vrot.lane.b32.xlu0 %v552, 80
        %v571 = vpop.permute.xlu0 %570
        %572 = vrot.lane.b32.xlu0 %v553, 80
        %v573 = vpop.permute.xlu0 %572
        %574 = vrot.lane.b32.xlu0 %v554, 80
        %v575 = vpop.permute.xlu0 %574
        %576 = vrot.lane.b32.xlu0 %v555, 80
        %v577 = vpop.permute.xlu0 %576
        %578 = vrot.lane.b32.xlu0 %v556, 80
        %v579 = vpop.permute.xlu0 %578
        %580 = vrot.lane.b32.xlu0 %v557, 80
        %v581 = vpop.permute.xlu0 %580
        %v590 = vmax.bf16 %v517, %v567
        %v591 = vmax.bf16 %v518, %v569
        %v592 = vmax.bf16 %v519, %v571
        %v593 = vmax.bf16 %v520, %v573
        %v594 = vmax.bf16 %v521, %v575
        %v595 = vmax.bf16 %v522, %v577
        %v596 = vmax.bf16 %v523, %v579
        %v597 = vmax.bf16 %v524, %v581
        %v598 = vunpack.c.l.bf16 %v590
        %v599 = vunpack.c.l.bf16 %v591
        %v600 = vunpack.c.l.bf16 %v592
        %v601 = vunpack.c.l.bf16 %v593
        %v602 = vunpack.c.l.bf16 %v594
        %v603 = vunpack.c.l.bf16 %v595
        %v604 = vunpack.c.l.bf16 %v596
        %v605 = vunpack.c.l.bf16 %v597
        %v606 = vld [vmem:[%s2] sm:$0x1]
        %v608 = vlaneseq
        %v609 = vshrl.u32 %v608, 7
        %v610 = vsub.s32 0, %v609
        %v611 = vrot.slane %v606, %v610
        %612 = vrot.lane.b32.xlu0 %v611, 48
        %v613 = vpop.permute.xlu0 %612
        %v615 = vmul.f32 %v598, %v613
        %v616 = vmul.f32 %v599, %v613
        %v617 = vmul.f32 %v600, %v613
        %v618 = vmul.f32 %v601, %v613
        %v619 = vmul.f32 %v602, %v613
        %v620 = vmul.f32 %v603, %v613
        %v621 = vmul.f32 %v604, %v613
        %v622 = vmul.f32 %v605, %v613
        %v623 = vld [vmem:[%s3] sm:$0x1]
        %v625 = vlaneseq
        %v626 = vshrl.u32 %v625, 7
        %v627 = vsub.s32 0, %v626
        %v628 = vrot.slane %v623, %v627
        %629 = vrot.lane.b32.xlu0 %v628, 48
        %v630 = vpop.permute.xlu0 %629
        %v632 = vadd.f32 %v615, %v630
        %v633 = vadd.f32 %v616, %v630
        %v634 = vadd.f32 %v617, %v630
        %v635 = vadd.f32 %v618, %v630
        %v636 = vadd.f32 %v619, %v630
        %v637 = vadd.f32 %v620, %v630
        %v638 = vadd.f32 %v621, %v630
        %v639 = vadd.f32 %v622, %v630
        %vm640 = vcmp.ge.f32.partialorder %v632, 0.0
        %vm641 = vcmp.ge.f32.partialorder %v633, 0.0
        %vm642 = vcmp.ge.f32.partialorder %v634, 0.0
        %vm643 = vcmp.ge.f32.partialorder %v635, 0.0
        %vm644 = vcmp.ge.f32.partialorder %v636, 0.0
        %vm645 = vcmp.ge.f32.partialorder %v637, 0.0
        %vm646 = vcmp.ge.f32.partialorder %v638, 0.0
        %vm647 = vcmp.ge.f32.partialorder %v639, 0.0
        %v648 = vld [vmem:[%s4] sm:$0x1]
        %v650 = vlaneseq
        %v651 = vshrl.u32 %v650, 7
        %v652 = vsub.s32 0, %v651
        %v653 = vrot.slane %v648, %v652
        %663 = vrot.lane.b32.xlu0 %v632, 80
        %v664 = vpop.permute.xlu0 %663
        %665 = vrot.lane.b32.xlu0 %v633, 80
        %v666 = vpop.permute.xlu0 %665
        %667 = vrot.lane.b32.xlu0 %v634, 80
        %v668 = vpop.permute.xlu0 %667
        %669 = vrot.lane.b32.xlu0 %v635, 80
        %v670 = vpop.permute.xlu0 %669
        %671 = vrot.lane.b32.xlu0 %v636, 80
        %v672 = vpop.permute.xlu0 %671
        %673 = vrot.lane.b32.xlu0 %v637, 80
        %v674 = vpop.permute.xlu0 %673
        %675 = vrot.lane.b32.xlu0 %v638, 80
        %v676 = vpop.permute.xlu0 %675
        %677 = vrot.lane.b32.xlu0 %v639, 80
        %v678 = vpop.permute.xlu0 %677
        %v687 = vmul.f32 %v653, %v664
        %v688 = vmul.f32 %v653, %v666
        %v689 = vmul.f32 %v653, %v668
        %v690 = vmul.f32 %v653, %v670
        %v691 = vmul.f32 %v653, %v672
        %v692 = vmul.f32 %v653, %v674
        %v693 = vmul.f32 %v653, %v676
        %v694 = vmul.f32 %v653, %v678
        %703 = vrot.lane.b32.xlu0 %v687, 48
        %v704 = vpop.permute.xlu0 %703
        %705 = vrot.lane.b32.xlu0 %v688, 48
        %v706 = vpop.permute.xlu0 %705
        %707 = vrot.lane.b32.xlu0 %v689, 48
        %v708 = vpop.permute.xlu0 %707
        %709 = vrot.lane.b32.xlu0 %v690, 48
        %v710 = vpop.permute.xlu0 %709
        %711 = vrot.lane.b32.xlu0 %v691, 48
        %v712 = vpop.permute.xlu0 %711
        %713 = vrot.lane.b32.xlu0 %v692, 48
        %v714 = vpop.permute.xlu0 %713
        %715 = vrot.lane.b32.xlu0 %v693, 48
        %v716 = vpop.permute.xlu0 %715
        %717 = vrot.lane.b32.xlu0 %v694, 48
        %v718 = vpop.permute.xlu0 %717
        %v727 = vsel %vm640, %v632, %v704
        %v728 = vsel %vm641, %v633, %v706
        %v729 = vsel %vm642, %v634, %v708
        %v730 = vsel %vm643, %v635, %v710
        %v731 = vsel %vm644, %v636, %v712
        %v732 = vsel %vm645, %v637, %v714
        %v733 = vsel %vm646, %v638, %v716
        %v734 = vsel %vm647, %v639, %v718
        %743 = vrot.lane.b32.xlu0 %v727, 80
        %v744 = vpop.permute.xlu0 %743
        %745 = vrot.lane.b32.xlu0 %v728, 80
        %v746 = vpop.permute.xlu0 %745
        %747 = vrot.lane.b32.xlu0 %v729, 80
        %v748 = vpop.permute.xlu0 %747
        %749 = vrot.lane.b32.xlu0 %v730, 80
        %v750 = vpop.permute.xlu0 %749
        %751 = vrot.lane.b32.xlu0 %v731, 80
        %v752 = vpop.permute.xlu0 %751
        %753 = vrot.lane.b32.xlu0 %v732, 80
        %v754 = vpop.permute.xlu0 %753
        %755 = vrot.lane.b32.xlu0 %v733, 80
        %v756 = vpop.permute.xlu0 %755
        %757 = vrot.lane.b32.xlu0 %v734, 80
        %v758 = vpop.permute.xlu0 %757
        %vm767 = vcmask 261248
        %768 = vst.msk [vmem:[%s220] sm:$0xff] %vm767, %v744
        %769 = vst.msk [vmem:[%s220 + $0x8] sm:$0xff] %vm767, %v746
        %770 = vst.msk [vmem:[%s220 + $0x10] sm:$0xff] %vm767, %v748
        %771 = vst.msk [vmem:[%s220 + $0x18] sm:$0xff] %vm767, %v750
        %772 = vst.msk [vmem:[%s220 + $0x20] sm:$0xff] %vm767, %v752
        %773 = vst.msk [vmem:[%s220 + $0x28] sm:$0xff] %vm767, %v754
        %774 = vst.msk [vmem:[%s220 + $0x30] sm:$0xff] %vm767, %v756
        %775 = vst.msk [vmem:[%s220 + $0x38] sm:$0xff] %vm767, %v758
        %s776 = sand.u32 %s137, 1
        %s777 = scalar_lea.sflag [#allocation3], %s776
        %s778 = sand.u32 %s137, 1
        %s779 = smul.addr %s778, 64
        %s780 = scalar_lea.vmem [#allocation2], %s779
        // Predicated region
        $region41: #{downsampling_block_forward.1} parent=39 // pred_check
          %p781 = pneg %p147
        $region42: #{downsampling_block_forward.1} parent=39 // pred_check_branch
          %783 = sbr.rel (%p781) target = $region44
        $region43: #{downsampling_block_forward.1} parent=39 // pred_region
          %s784 = smul.u32 8, %s19
          %s786 = ssub.s32 1024, 1024
          %787 = vsyncadd %s777, %s786
          %s788 = smul.addr %s784, 128
          %s789 = scalar_lea.hbm %s5, %s788
          %s790 = sshll.u32 %s780, 4
          %s791 = int_to_ptr.vmem [resolvable:$true] %s790
          %796 = dma.vmem_to_hbm [thread:$0]  %s791, 1024, %s789, %s777, 128, 128, 8
        $region44: #{downsampling_block_forward.1} parent=39 // pred_fallthru
          _
      $region40: #{downsampling_block_forward.1} parent=5 // pred_fallthru
        _
      %p797 = scmp.le.s32.totalorder 2, %s14
      // Predicated region
      $region45: #{downsampling_block_forward.1} parent=5 // pred_check
        %p798 = pneg %p797
      $region46: #{downsampling_block_forward.1} parent=5 // pred_check_branch
        %800 = sbr.rel (%p798) target = $region48
      $region47: #{downsampling_block_forward.1} parent=5 // pred_region
        %s801 = ssub.s32 %s14, 2
        // Predicated region
        $region49: #{downsampling_block_forward.1} parent=47 // pred_check
          %p802 = pneg %p153
        $region50: #{downsampling_block_forward.1} parent=47 // pred_check_branch
          %804 = sbr.rel (%p802) target = $region52
        $region51: #{downsampling_block_forward.1} parent=47 // pred_region
          %s805 = sand.u32 %s138, 1
          %s806 = scalar_lea.sflag [#allocation3], %s805
          %s807 = sand.u32 %s138, 1
          %s808 = smul.addr %s807, 64
          %s809 = scalar_lea.vmem [#allocation2], %s808
          %810 = dma.done %s806, 1024
        $region52: #{downsampling_block_forward.1} parent=47 // pred_fallthru
          _
      $region48: #{downsampling_block_forward.1} parent=5 // pred_fallthru
        _
    $region6: #{downsampling_block_forward.1} parent=1 // loop_footer
      %s18 = sadd.s32 1, %s14
    $region7: #{downsampling_block_forward.1} parent=1 // loop_footer_branch
      %13 = sbr.rel target = $region3
    $region8: #{downsampling_block_forward.1} parent=1 // loop_exit
      _
    %811 = vsyncpa [#allocation3], 1
    %s812 = scalar_lea.sflag [#allocation3], 1
    %813 = vsyncpa %s812, 1

</llo_original>
